<compile_context>
chip_gen: v5e
topology: v5e:2x2
jax: 0.10.0
libtpu: 0.0.40
codegen_flags: <defaults>
</compile_context>

<pallas_src>
import jax
import jax.numpy as jnp
from jax.experimental import pallas as pl
from jax.experimental.pallas import tpu as pltpu


def _relu_maxpool_kernel(x_ref, sel_ref, o_ref):
    """ReLU + 3x3 / stride-2 / pad-1 max pool for one block of (N*C) planes.

    x_ref  : (bp, h_out, 2*w)   input rows 2i in lanes [0, w), rows 2i+1 in [w, 2w)
    sel_ref: (w-1, 2*w_out)     constant 0/1 column-tap selector (resident)
    o_ref  : (bp, h_out, w_out)
    """
    bp, h_out, w2 = x_ref.shape
    w = w2 // 2
    w_out = o_ref.shape[-1]
    m = bp * h_out

    # 2-tap max over adjacent lanes (pre-ReLU).  Lanes [0, w-1) hold the even-row
    # pairs max(x[2i, t], x[2i, t+1]); lanes [w, 2w-1) the odd-row pairs; lane w-1
    # mixes the two rows and is excluded from both matmul inputs below.
    y = x_ref[...]
    m2 = jnp.maximum(y[:, :, :-1], y[:, :, 1:])                # (bp, h_out, 2w-1)

    # Column pool + stride-2 compaction: one 2-D 0/1-selector matmul per row parity
    # (M = bp*h_out, shared selector).  Selector columns [0, w_out) pick tap start 2j,
    # columns [w_out, 2*w_out) pick start 2j-1 (all-zero for j=0, the "col -1" pad).
    sel = sel_ref[...]
    ab_e = jnp.dot(m2[:, :, :w - 1].reshape(m, w - 1), sel,
                   preferred_element_type=jnp.float32)         # (m, 2*w_out)
    ab_o = jnp.dot(m2[:, :, w:].reshape(m, w - 1), sel,
                   preferred_element_type=jnp.float32)
    cp_even = jnp.maximum(ab_e[:, :w_out], ab_e[:, w_out:]).reshape(bp, h_out, w_out)
    cp_odd = jnp.maximum(ab_o[:, :w_out], ab_o[:, w_out:]).reshape(bp, h_out, w_out)

    # Row combine + deferred ReLU (relu/max commute, so pooling pre-ReLU values and
    # clamping at 0 here is exact; it also makes the selector's zero columns and the
    # wrapper's zero padding equivalent to MaxPool2d's implicit -inf pad taps).
    # Output row i pools input rows {2i-1, 2i, 2i+1}; row 2i-1 is the odd row of
    # pair i-1, and row -1 is pool padding (drops).
    v = jnp.maximum(jnp.maximum(cp_even, cp_odd), 0.0)
    o_ref[:, :1, :] = v[:, :1, :].astype(o_ref.dtype)
    if h_out > 1:
        o_ref[:, 1:, :] = jnp.maximum(
            v[:, 1:, :], cp_odd[:, :-1, :]).astype(o_ref.dtype)


def rgbd_net_forward(x, depth=None, *, vmem_budget_bytes=None):
    """Pallas implementation of RGBDNet.forward: relu -> maxpool(k=3, s=2, p=1)."""
    del depth  # unused by the reference forward
    n, ch, h, w = x.shape
    # Odd spatial dims: append one zero row/col.  Exact because pooling happens
    # pre-ReLU with 0 pad taps and ReLU is applied last (see kernel).  No-op (and no
    # extra HBM pass) for even sizes.
    if (h % 2) or (w % 2):
        x = jnp.pad(x, ((0, 0), (0, 0), (0, h % 2), (0, w % 2)))
        h, w = h + (h % 2), w + (w % 2)
    h_out, w_out = h // 2, w // 2
    p = n * ch

    # Free row-major reshape: each plane (h, w) -> (h/2, 2w); even input rows occupy
    # the first w lanes of a row pair, odd rows the last w.  No extra HBM pass.
    xr = x.reshape(p, h_out, 2 * w)

    # Hoisted 0/1 tap selector, shared by both row parities: output col j pools taps
    # {2j-1, 2j, 2j+1} = max of the 2-tap maxes starting at 2j and 2j-1.
    t = jnp.arange(w - 1)[:, None]
    j = jnp.arange(w_out)[None, :]
    sel = jnp.concatenate([t == 2 * j, t == 2 * j - 1], axis=1).astype(x.dtype)

    # ---- block sizing: (8,128)-padded-tile-aware VMEM budget ----------------------
    def ceil_to(a, mult):
        return -(-a // mult) * mult

    itemsize = jnp.dtype(x.dtype).itemsize
    in_pad = ceil_to(h_out, 8) * ceil_to(2 * w, 128)        # padded elems/plane, input
    out_pad = ceil_to(h_out, 8) * ceil_to(w_out, 128)       # padded elems/plane, output
    acc_pad = ceil_to(h_out, 8) * ceil_to(2 * w_out, 128)   # padded elems/plane, dot out
    per_plane = (itemsize * 2 * (in_pad + out_pad)          # double-buffered I/O blocks
                 + itemsize * in_pad                        # 2-tap-max intermediate
                 + 4 * (2 * acc_pad + 3 * out_pad))         # f32 dot results + pooled temps
    sel_bytes = 2 * itemsize * ceil_to(w - 1, 8) * ceil_to(2 * w_out, 128)

    try:
        vmem_cap = int(pltpu.get_tpu_info().vmem_capacity_bytes)
    except Exception:  # fall back to the smallest current generation (v7x: 64 MiB/TC)
        vmem_cap = 64 << 20
    if vmem_budget_bytes is None:
        # ~1/3 of per-core VMEM: ~40 MiB on v5e/v6e (128 MiB), ~21 MiB on v7x (64 MiB).
        vmem_budget_bytes = max(8 << 20, min(vmem_cap // 3, 40 << 20))

    # Largest plane-count block that fits the budget, snapped down to a divisor of p
    # so the last grid step never touches out-of-range planes.
    block_budget = max(per_plane, vmem_budget_bytes - sel_bytes)
    bp = int(max(1, min(p, block_budget // per_plane)))
    while p % bp:
        bp -= 1
    steps = p // bp
    # For non-trivial sizes prefer >= 4 (and an even number of) steps: keeps both v7x
    # TensorCores fed and the I/O DMAs double-buffered.  Tiny problems stay at one
    # step, where the ~0.35us/step overhead would dominate.
    if p >= 4 and p * per_plane > (2 << 20):
        target = max(steps, 4)
        target += target % 2
        while target < p and p % target:
            target += 1
        target = min(target, p)
        steps = target
        bp = p // steps

    vmem_needed = bp * per_plane + sel_bytes
    vmem_limit = int(min(max(16 << 20, vmem_needed + (6 << 20)), vmem_cap))

    out = pl.pallas_call(
        _relu_maxpool_kernel,
        out_shape=jax.ShapeDtypeStruct((p, h_out, w_out), x.dtype),
        grid=(steps,),
        in_specs=[
            pl.BlockSpec((bp, h_out, 2 * w), lambda i: (i, 0, 0)),
            pl.BlockSpec((w - 1, 2 * w_out), lambda i: (0, 0)),  # resident constant
        ],
        out_specs=pl.BlockSpec((bp, h_out, w_out), lambda i: (i, 0, 0)),
        compiler_params=pltpu.CompilerParams(
            dimension_semantics=("parallel",),
            vmem_limit_bytes=vmem_limit,
        ),
    )(xr, sel)
    return out.reshape(n, ch, h_out, w_out)


def init_params(key):
    # __init__ declares conv1 = Conv2d(3, 64, k=3, s=2, p=1, bias=False); it is NOT
    # used in forward().  Initialized deterministically for completeness only.
    wgt = jax.random.normal(key, (64, 3, 3, 3), jnp.float32) * (2.0 / 27.0) ** 0.5
    return {"conv1_w": wgt}


def _reference(x):
    y = jnp.maximum(x, 0.0)
    return jax.lax.reduce_window(
        y, -jnp.inf, jax.lax.max,
        window_dimensions=(1, 1, 3, 3),
        window_strides=(1, 1, 2, 2),
        padding=((0, 0), (0, 0), (1, 1), (1, 1)),
    )


if __name__ == "__main__":
    key = jax.random.PRNGKey(0)
    kx, kd, kp, ko = jax.random.split(key, 4)

    x = jax.random.normal(kx, (2, 4, 16, 16), jnp.float32)      # NCHW
    depth = jax.random.normal(kd, (2, 1, 16, 16), jnp.float32)  # unused by forward
    _params = init_params(kp)                                   # declared but unused in forward

    out = rgbd_net_forward(x, depth)
    out = jax.block_until_ready(out)
    ref = _reference(x)
    assert out.shape == (2, 4, 8, 8), out.shape
    assert jnp.allclose(out, ref, atol=1e-5, rtol=1e-5), "mismatch vs reference"

    # Odd spatial size (exercises the pad-to-even path).
    x2 = jax.random.normal(ko, (1, 3, 15, 17), jnp.float32)
    out2 = jax.block_until_ready(rgbd_net_forward(x2))
    ref2 = _reference(x2)
    assert out2.shape == ref2.shape == (1, 3, 8, 9), (out2.shape, ref2.shape)
    assert jnp.allclose(out2, ref2, atol=1e-5, rtol=1e-5), "mismatch vs reference (odd)"

    print("KERNEL_OK")
</pallas_src>

<mosaic_0001>
module attributes {stable_mosaic.version = 11 : i64} {
  func.func @_relu_maxpool_kernel(%arg0: i32, %arg1: memref<8x8x32xf32, #tpu.memory_space<vmem>>, %arg2: memref<15x16xf32, #tpu.memory_space<vmem>>, %arg3: memref<8x8x8xf32, #tpu.memory_space<vmem>>) attributes {dimension_semantics = [#tpu.dimension_semantics<parallel>], iteration_bounds = array<i64: 1>, scalar_prefetch = 0 : i64, scratch_operands = 0 : i64, tpu.core_type = #tpu.core_type<tc>, window_params = [{transform_indices = @transform_0, window_bounds = array<i64: 8, 8, 32>}, {pipeline_mode = #tpu.pipeline_mode<synchronous>, transform_indices = @transform_1, window_bounds = array<i64: 15, 16>}, {transform_indices = @transform_2, window_bounds = array<i64: 8, 8, 8>}]} {
    %c0 = arith.constant 0 : index
    %c0_0 = arith.constant 0 : index
    %c0_1 = arith.constant 0 : index
    %0 = vector.load %arg1[%c0, %c0_0, %c0_1] : memref<8x8x32xf32, #tpu.memory_space<vmem>>, vector<8x8x32xf32>
    %1 = vector.extract_strided_slice %0 {offsets = [0, 0, 0], sizes = [8, 8, 31], strides = [1, 1, 1]} : vector<8x8x32xf32> to vector<8x8x31xf32>
    %2 = vector.extract_strided_slice %0 {offsets = [0, 0, 1], sizes = [8, 8, 31], strides = [1, 1, 1]} : vector<8x8x32xf32> to vector<8x8x31xf32>
    %3 = arith.maximumf %1, %2 : vector<8x8x31xf32>
    %c0_2 = arith.constant 0 : index
    %c0_3 = arith.constant 0 : index
    %4 = vector.load %arg2[%c0_2, %c0_3] : memref<15x16xf32, #tpu.memory_space<vmem>>, vector<15x16xf32>
    %5 = vector.extract_strided_slice %3 {offsets = [0, 0, 0], sizes = [8, 8, 15], strides = [1, 1, 1]} : vector<8x8x31xf32> to vector<8x8x15xf32>
    %6 = vector.shape_cast %5 : vector<8x8x15xf32> to vector<64x15xf32>
    %cst = arith.constant dense<0.000000e+00> : vector<64x16xf32>
    %7 = tpu.matmul %6, %4, %cst {dimension_numbers = #tpu.dot_dimension_numbers<[1], [0], [0], [1], [0, 0, 1, 1], [], []>} : vector<64x15xf32>, vector<15x16xf32>, vector<64x16xf32> -> vector<64x16xf32>
    %8 = vector.extract_strided_slice %3 {offsets = [0, 0, 16], sizes = [8, 8, 15], strides = [1, 1, 1]} : vector<8x8x31xf32> to vector<8x8x15xf32>
    %9 = vector.shape_cast %8 : vector<8x8x15xf32> to vector<64x15xf32>
    %cst_4 = arith.constant dense<0.000000e+00> : vector<64x16xf32>
    %10 = tpu.matmul %9, %4, %cst_4 {dimension_numbers = #tpu.dot_dimension_numbers<[1], [0], [0], [1], [0, 0, 1, 1], [], []>} : vector<64x15xf32>, vector<15x16xf32>, vector<64x16xf32> -> vector<64x16xf32>
    %11 = vector.extract_strided_slice %7 {offsets = [0, 0], sizes = [64, 8], strides = [1, 1]} : vector<64x16xf32> to vector<64x8xf32>
    %12 = vector.extract_strided_slice %7 {offsets = [0, 8], sizes = [64, 8], strides = [1, 1]} : vector<64x16xf32> to vector<64x8xf32>
    %13 = arith.maximumf %11, %12 : vector<64x8xf32>
    %14 = vector.shape_cast %13 : vector<64x8xf32> to vector<8x8x8xf32>
    %15 = vector.extract_strided_slice %10 {offsets = [0, 0], sizes = [64, 8], strides = [1, 1]} : vector<64x16xf32> to vector<64x8xf32>
    %16 = vector.extract_strided_slice %10 {offsets = [0, 8], sizes = [64, 8], strides = [1, 1]} : vector<64x16xf32> to vector<64x8xf32>
    %17 = arith.maximumf %15, %16 : vector<64x8xf32>
    %18 = vector.shape_cast %17 : vector<64x8xf32> to vector<8x8x8xf32>
    %19 = arith.maximumf %14, %18 : vector<8x8x8xf32>
    %cst_5 = arith.constant 0.000000e+00 : f32
    %20 = vector.broadcast %cst_5 : f32 to vector<8x8x8xf32>
    %21 = arith.maximumf %19, %20 : vector<8x8x8xf32>
    %22 = vector.extract_strided_slice %21 {offsets = [0, 0, 0], sizes = [8, 1, 8], strides = [1, 1, 1]} : vector<8x8x8xf32> to vector<8x1x8xf32>
    %c0_6 = arith.constant 0 : index
    %c0_7 = arith.constant 0 : index
    %c0_8 = arith.constant 0 : index
    %23 = vector.load %arg3[%c0_6, %c0_7, %c0_8] : memref<8x8x8xf32, #tpu.memory_space<vmem>>, vector<8x1x8xf32>
    tpu.vector_store %arg3[%c0_6, %c0_7, %c0_8], %22 {strides = array<i32>} : memref<8x8x8xf32, #tpu.memory_space<vmem>>, vector<8x1x8xf32>,
    %24 = vector.extract_strided_slice %21 {offsets = [0, 1, 0], sizes = [8, 7, 8], strides = [1, 1, 1]} : vector<8x8x8xf32> to vector<8x7x8xf32>
    %25 = vector.extract_strided_slice %18 {offsets = [0, 0, 0], sizes = [8, 7, 8], strides = [1, 1, 1]} : vector<8x8x8xf32> to vector<8x7x8xf32>
    %26 = arith.maximumf %24, %25 : vector<8x7x8xf32>
    %c0_9 = arith.constant 0 : index
    %c1 = arith.constant 1 : index
    %c0_10 = arith.constant 0 : index
    %27 = vector.load %arg3[%c0_9, %c1, %c0_10] : memref<8x8x8xf32, #tpu.memory_space<vmem>>, vector<8x7x8xf32>
    tpu.vector_store %arg3[%c0_9, %c1, %c0_10], %26 {strides = array<i32>} : memref<8x8x8xf32, #tpu.memory_space<vmem>>, vector<8x7x8xf32>,
    return
  }
  func.func @transform_0(%arg0: i32) -> (i32, i32, i32) {
    %c0_i32 = arith.constant 0 : i32
    %c0_i32_0 = arith.constant 0 : i32
    %c0_i32_1 = arith.constant 0 : i32
    return %arg0, %c0_i32, %c0_i32_0 : i32, i32, i32
  }
  func.func @transform_1(%arg0: i32) -> (i32, i32) {
    %c0_i32 = arith.constant 0 : i32
    %c0_i32_0 = arith.constant 0 : i32
    %c0_i32_1 = arith.constant 0 : i32
    return %c0_i32, %c0_i32_0 : i32, i32
  }
  func.func @transform_2(%arg0: i32) -> (i32, i32, i32) {
    %c0_i32 = arith.constant 0 : i32
    %c0_i32_0 = arith.constant 0 : i32
    %c0_i32_1 = arith.constant 0 : i32
    return %arg0, %c0_i32, %c0_i32_0 : i32, i32, i32
  }
}

</mosaic_0001>

<llo_original>
// kernel: tpu_custom_call.1
$region0: #{tpu_custom_call.1}
  #allocation0 [shape = 'u32[]', space=smem, size = 0x4, offset = 0x4, fixed_abs, tag = 'smem constant byte address 0x4 - core index']
  #allocation1 [shape = 'u32[72,128]{1,0:T(1,128)}', space=vmem, size = 0x9000, scoped, tag = 'internal scratch']
  %s0 = inlined_call_operand.hbm [shape: f32[8,8,32], index: 0, kind: input, shape index: {}]
  %s1 = inlined_call_operand.hbm [shape: f32[15,16], index: 1, kind: input, shape index: {}]
  %s2 = inlined_call_operand.hbm [shape: f32[8,8,8], index: 2, kind: output, shape index: {}]
  %s3 = sld [smem:[#allocation0]]
  $region26: #{tpu_custom_call.1} parent=0
    _
  %s5 = ssub.s32 1, %s3
  %s6 = scalar_select 0, %s5, %s3
  $region1: #{tpu_custom_call.1} parent=0
    #allocation2 [shape = 'u8[32768]{0}', space=vmem, size = 0x8000, scoped, tag = 'input window, operand 0, single buffered']
    #allocation3 [shape = 's32[1]{0}', space=sflag, size = 0x4, scoped, tag = 'scoped memory for tpu_custom_call.1']
    #allocation4 [shape = 's32[1]{0}', space=sflag, size = 0x4, scoped, tag = 'scoped memory for tpu_custom_call.1']
    #allocation5 [shape = 'u8[8192]{0}', space=vmem, size = 0x2000, scoped, tag = 'input window, operand 1, single buffered']
    #allocation6 [shape = 's32[1]{0}', space=sflag, size = 0x4, scoped, tag = 'scoped memory for tpu_custom_call.1']
    #allocation7 [shape = 'u8[32768]{0}', space=vmem, size = 0x8000, scoped, tag = 'output window, operand 0, single buffered']
    %7 = vsyncpa [#allocation3], 0
    %8 = vsyncpa [#allocation6], 0
    %9 = vsyncpa [#allocation4], 0
    // Predicated region
    $region2: #{tpu_custom_call.1} parent=1 // pred_check
      _
    $region3: #{tpu_custom_call.1} parent=1 // pred_check_branch
      %11 = sbr.rel (0) target = $region5
    $region4: #{tpu_custom_call.1} parent=1 // pred_region
      %13 = vsyncadd [#allocation3], 0
      %s14 = sshll.u32 %s0, 4
      %s15 = int_to_ptr.hbm [resolvable:$true] %s14
      %s16 = sshll.u32 [#allocation2], 4
      %s17 = int_to_ptr.vmem [resolvable:$true] %s16
      %22 = dma.hbm_to_vmem [thread:$0]  %s15, 1024, %s17, [#allocation3], 128, 128, 8
    $region5: #{tpu_custom_call.1} parent=1 // pred_fallthru
      _
    // Predicated region
    $region6: #{tpu_custom_call.1} parent=1 // pred_check
      _
    $region7: #{tpu_custom_call.1} parent=1 // pred_check_branch
      %24 = sbr.rel (0) target = $region9
    $region8: #{tpu_custom_call.1} parent=1 // pred_region
      %26 = vsyncadd [#allocation6], 0
      %s27 = sshll.u32 %s1, 4
      %s28 = int_to_ptr.hbm [resolvable:$true] %s27
      %s29 = sshll.u32 [#allocation5], 4
      %s30 = int_to_ptr.vmem [resolvable:$true] %s29
      %35 = dma.hbm_to_vmem [thread:$0]  %s28, 256, %s30, [#allocation6], 128, 128, 8
    $region9: #{tpu_custom_call.1} parent=1 // pred_fallthru
      _
    // Predicated region
    $region10: #{tpu_custom_call.1} parent=1 // pred_check
      _
    $region11: #{tpu_custom_call.1} parent=1 // pred_check_branch
      %37 = sbr.rel (0) target = $region13
    $region12: #{tpu_custom_call.1} parent=1 // pred_region
      %39 = dma.done [#allocation3], 1024
    $region13: #{tpu_custom_call.1} parent=1 // pred_fallthru
      _
    // Predicated region
    $region14: #{tpu_custom_call.1} parent=1 // pred_check
      _
    $region15: #{tpu_custom_call.1} parent=1 // pred_check_branch
      %41 = sbr.rel (0) target = $region17
    $region16: #{tpu_custom_call.1} parent=1 // pred_region
      %43 = dma.done [#allocation6], 256
    $region17: #{tpu_custom_call.1} parent=1 // pred_fallthru
      _
    %v44 = vld [vmem:[#allocation2] sm:$0xff]
    %v45 = vld [vmem:[#allocation2 + $0x8] sm:$0xff]
    %v46 = vld [vmem:[#allocation2 + $0x10] sm:$0xff]
    %v47 = vld [vmem:[#allocation2 + $0x18] sm:$0xff]
    %v48 = vld [vmem:[#allocation2 + $0x20] sm:$0xff]
    %v49 = vld [vmem:[#allocation2 + $0x28] sm:$0xff]
    %v50 = vld [vmem:[#allocation2 + $0x30] sm:$0xff]
    %v51 = vld [vmem:[#allocation2 + $0x38] sm:$0xff]
    %60 = vrot.lane.b32.xlu0 %v44, 127
    %v61 = vpop.permute.xlu0 %60
    %62 = vrot.lane.b32.xlu0 %v45, 127
    %v63 = vpop.permute.xlu0 %62
    %64 = vrot.lane.b32.xlu0 %v46, 127
    %v65 = vpop.permute.xlu0 %64
    %66 = vrot.lane.b32.xlu0 %v47, 127
    %v67 = vpop.permute.xlu0 %66
    %68 = vrot.lane.b32.xlu0 %v48, 127
    %v69 = vpop.permute.xlu0 %68
    %70 = vrot.lane.b32.xlu0 %v49, 127
    %v71 = vpop.permute.xlu0 %70
    %72 = vrot.lane.b32.xlu0 %v50, 127
    %v73 = vpop.permute.xlu0 %72
    %74 = vrot.lane.b32.xlu0 %v51, 127
    %v75 = vpop.permute.xlu0 %74
    %v84 = vmax.f32 %v44, %v61
    %v85 = vmax.f32 %v45, %v63
    %v86 = vmax.f32 %v46, %v65
    %v87 = vmax.f32 %v47, %v67
    %v88 = vmax.f32 %v48, %v69
    %v89 = vmax.f32 %v49, %v71
    %v90 = vmax.f32 %v50, %v73
    %v91 = vmax.f32 %v51, %v75
    %v92 = vld [vmem:[#allocation5] sm:$0xff]
    %v93 = vld [vmem:[#allocation5 + $0x8] sm:$0x7f]
    %vm94 = vcmask 121856
    %v96 = vsel %vm94, %v84, 0
    %v99 = vsel %vm94, %v85, 0
    %v102 = vsel %vm94, %v86, 0
    %v105 = vsel %vm94, %v87, 0
    %v108 = vsel %vm94, %v88, 0
    %v111 = vsel %vm94, %v89, 0
    %v114 = vsel %vm94, %v90, 0
    %v117 = vsel %vm94, %v91, 0
    %vm119 = vcmask 1046528
    %v121 = vsel %vm119, %v93, 0
    %123 = vmatpush.msra.mxu0 0.0
    %124 = vmatpush.msra.mxu0 0.0
    %125 = vmatpush.msra.mxu0 0.0
    %126 = vmatpush.msra.mxu0 0.0
    %127 = vmatpush.msra.mxu0 0.0
    %128 = vmatpush.msra.mxu0 0.0
    %129 = vmatpush.msra.mxu0 0.0
    %130 = vmatpush.msra.mxu0 0.0
    %131 = vmatpush.msra.mxu0 0.0
    %132 = vmatpush.msra.mxu0 0.0
    %133 = vmatpush.msra.mxu0 0.0
    %134 = vmatpush.msra.mxu0 0.0
    %135 = vmatpush.msra.mxu0 0.0
    %136 = vmatpush.msra.mxu0 0.0
    %137 = vmatpush.msra.mxu0 %v121
    %138 = vmatpush.msra.mxu0 %v92
    %139 = vmatmul.f32.gmra.mxu0 %v96
    %v140 = vpop.f32.mrf.mxu0
    %v141 = vadd.f32 0.0, %v140
    %142 = vmatmul.f32.gmra.mxu0 %v99
    %v143 = vpop.f32.mrf.mxu0
    %v144 = vadd.f32 0.0, %v143
    %145 = vmatmul.f32.gmra.mxu0 %v102
    %v146 = vpop.f32.mrf.mxu0
    %v147 = vadd.f32 0.0, %v146
    %148 = vmatmul.f32.gmra.mxu0 %v105
    %v149 = vpop.f32.mrf.mxu0
    %v150 = vadd.f32 0.0, %v149
    %151 = vmatmul.f32.gmra.mxu0 %v108
    %v152 = vpop.f32.mrf.mxu0
    %v153 = vadd.f32 0.0, %v152
    %154 = vmatmul.f32.gmra.mxu0 %v111
    %v155 = vpop.f32.mrf.mxu0
    %v156 = vadd.f32 0.0, %v155
    %157 = vmatmul.f32.gmra.mxu0 %v114
    %v158 = vpop.f32.mrf.mxu0
    %v159 = vadd.f32 0.0, %v158
    %160 = vmatmul.f32.gmra.mxu0 %v117
    %v161 = vpop.f32.mrf.mxu0
    %v162 = vadd.f32 0.0, %v161
    %163 = vdwg.mxu0
    %164 = vrot.lane.b32.xlu0 %v84, 112
    %v165 = vpop.permute.xlu0 %164
    %166 = vrot.lane.b32.xlu0 %v85, 112
    %v167 = vpop.permute.xlu0 %166
    %168 = vrot.lane.b32.xlu0 %v86, 112
    %v169 = vpop.permute.xlu0 %168
    %170 = vrot.lane.b32.xlu0 %v87, 112
    %v171 = vpop.permute.xlu0 %170
    %172 = vrot.lane.b32.xlu0 %v88, 112
    %v173 = vpop.permute.xlu0 %172
    %174 = vrot.lane.b32.xlu0 %v89, 112
    %v175 = vpop.permute.xlu0 %174
    %176 = vrot.lane.b32.xlu0 %v90, 112
    %v177 = vpop.permute.xlu0 %176
    %178 = vrot.lane.b32.xlu0 %v91, 112
    %v179 = vpop.permute.xlu0 %178
    %v180 = vsel %vm94, %v165, 0
    %v182 = vsel %vm94, %v167, 0
    %v184 = vsel %vm94, %v169, 0
    %v186 = vsel %vm94, %v171, 0
    %v188 = vsel %vm94, %v173, 0
    %v190 = vsel %vm94, %v175, 0
    %v192 = vsel %vm94, %v177, 0
    %v194 = vsel %vm94, %v179, 0
    %196 = vmatpush.msra.mxu0 0.0
    %197 = vmatpush.msra.mxu0 0.0
    %198 = vmatpush.msra.mxu0 0.0
    %199 = vmatpush.msra.mxu0 0.0
    %200 = vmatpush.msra.mxu0 0.0
    %201 = vmatpush.msra.mxu0 0.0
    %202 = vmatpush.msra.mxu0 0.0
    %203 = vmatpush.msra.mxu0 0.0
    %204 = vmatpush.msra.mxu0 0.0
    %205 = vmatpush.msra.mxu0 0.0
    %206 = vmatpush.msra.mxu0 0.0
    %207 = vmatpush.msra.mxu0 0.0
    %208 = vmatpush.msra.mxu0 0.0
    %209 = vmatpush.msra.mxu0 0.0
    %210 = vmatpush.msra.mxu0 %v121
    %211 = vmatpush.msra.mxu0 %v92
    %212 = vmatmul.f32.gmra.mxu0 %v180
    %v213 = vpop.f32.mrf.mxu0
    %v214 = vadd.f32 0.0, %v213
    %215 = vmatmul.f32.gmra.mxu0 %v182
    %v216 = vpop.f32.mrf.mxu0
    %v217 = vadd.f32 0.0, %v216
    %218 = vmatmul.f32.gmra.mxu0 %v184
    %v219 = vpop.f32.mrf.mxu0
    %v220 = vadd.f32 0.0, %v219
    %221 = vmatmul.f32.gmra.mxu0 %v186
    %v222 = vpop.f32.mrf.mxu0
    %v223 = vadd.f32 0.0, %v222
    %224 = vmatmul.f32.gmra.mxu0 %v188
    %v225 = vpop.f32.mrf.mxu0
    %v226 = vadd.f32 0.0, %v225
    %227 = vmatmul.f32.gmra.mxu0 %v190
    %v228 = vpop.f32.mrf.mxu0
    %v229 = vadd.f32 0.0, %v228
    %230 = vmatmul.f32.gmra.mxu0 %v192
    %v231 = vpop.f32.mrf.mxu0
    %v232 = vadd.f32 0.0, %v231
    %233 = vmatmul.f32.gmra.mxu0 %v194
    %v234 = vpop.f32.mrf.mxu0
    %v235 = vadd.f32 0.0, %v234
    %236 = vdwg.mxu0
    %245 = vrot.lane.b32.xlu0 %v141, 120
    %v246 = vpop.permute.xlu0 %245
    %247 = vrot.lane.b32.xlu0 %v144, 120
    %v248 = vpop.permute.xlu0 %247
    %249 = vrot.lane.b32.xlu0 %v147, 120
    %v250 = vpop.permute.xlu0 %249
    %251 = vrot.lane.b32.xlu0 %v150, 120
    %v252 = vpop.permute.xlu0 %251
    %253 = vrot.lane.b32.xlu0 %v153, 120
    %v254 = vpop.permute.xlu0 %253
    %255 = vrot.lane.b32.xlu0 %v156, 120
    %v256 = vpop.permute.xlu0 %255
    %257 = vrot.lane.b32.xlu0 %v159, 120
    %v258 = vpop.permute.xlu0 %257
    %259 = vrot.lane.b32.xlu0 %v162, 120
    %v260 = vpop.permute.xlu0 %259
    %v269 = vmax.f32 %v141, %v246
    %v270 = vmax.f32 %v144, %v248
    %v271 = vmax.f32 %v147, %v250
    %v272 = vmax.f32 %v150, %v252
    %v273 = vmax.f32 %v153, %v254
    %v274 = vmax.f32 %v156, %v256
    %v275 = vmax.f32 %v159, %v258
    %v276 = vmax.f32 %v162, %v260
    %285 = vrot.lane.b32.xlu0 %v214, 120
    %v286 = vpop.permute.xlu0 %285
    %287 = vrot.lane.b32.xlu0 %v217, 120
    %v288 = vpop.permute.xlu0 %287
    %289 = vrot.lane.b32.xlu0 %v220, 120
    %v290 = vpop.permute.xlu0 %289
    %291 = vrot.lane.b32.xlu0 %v223, 120
    %v292 = vpop.permute.xlu0 %291
    %293 = vrot.lane.b32.xlu0 %v226, 120
    %v294 = vpop.permute.xlu0 %293
    %295 = vrot.lane.b32.xlu0 %v229, 120
    %v296 = vpop.permute.xlu0 %295
    %297 = vrot.lane.b32.xlu0 %v232, 120
    %v298 = vpop.permute.xlu0 %297
    %299 = vrot.lane.b32.xlu0 %v235, 120
    %v300 = vpop.permute.xlu0 %299
    %v309 = vmax.f32 %v214, %v286
    %v310 = vmax.f32 %v217, %v288
    %v311 = vmax.f32 %v220, %v290
    %v312 = vmax.f32 %v223, %v292
    %v313 = vmax.f32 %v226, %v294
    %v314 = vmax.f32 %v229, %v296
    %v315 = vmax.f32 %v232, %v298
    %v316 = vmax.f32 %v235, %v300
    %v317 = vmax.f32 %v269, %v309
    %v318 = vmax.f32 %v270, %v310
    %v319 = vmax.f32 %v271, %v311
    %v320 = vmax.f32 %v272, %v312
    %v321 = vmax.f32 %v273, %v313
    %v322 = vmax.f32 %v274, %v314
    %v323 = vmax.f32 %v275, %v315
    %v324 = vmax.f32 %v276, %v316
    %v325 = vmax.f32 %v317, 0.0
    %v326 = vmax.f32 %v318, 0.0
    %v327 = vmax.f32 %v319, 0.0
    %v328 = vmax.f32 %v320, 0.0
    %v329 = vmax.f32 %v321, 0.0
    %v330 = vmax.f32 %v322, 0.0
    %v331 = vmax.f32 %v323, 0.0
    %v332 = vmax.f32 %v324, 0.0
    %vm333 = vcmask 57344
    %334 = vst.msk [vmem:[#allocation7] sm:$0x1] %vm333, %v325
    %335 = vst.msk [vmem:[#allocation7 + $0x8] sm:$0x1] %vm333, %v326
    %336 = vst.msk [vmem:[#allocation7 + $0x10] sm:$0x1] %vm333, %v327
    %337 = vst.msk [vmem:[#allocation7 + $0x18] sm:$0x1] %vm333, %v328
    %338 = vst.msk [vmem:[#allocation7 + $0x20] sm:$0x1] %vm333, %v329
    %339 = vst.msk [vmem:[#allocation7 + $0x28] sm:$0x1] %vm333, %v330
    %340 = vst.msk [vmem:[#allocation7 + $0x30] sm:$0x1] %vm333, %v331
    %341 = vst.msk [vmem:[#allocation7 + $0x38] sm:$0x1] %vm333, %v332
    %v350 = vrot.slane %v309, 7
    %v351 = vrot.slane %v310, 7
    %v352 = vrot.slane %v311, 7
    %v353 = vrot.slane %v312, 7
    %v354 = vrot.slane %v313, 7
    %v355 = vrot.slane %v314, 7
    %v356 = vrot.slane %v315, 7
    %v357 = vrot.slane %v316, 7
    %v366 = vmax.f32 %v325, %v350
    %v367 = vmax.f32 %v326, %v351
    %v368 = vmax.f32 %v327, %v352
    %v369 = vmax.f32 %v328, %v353
    %v370 = vmax.f32 %v329, %v354
    %v371 = vmax.f32 %v330, %v355
    %v372 = vmax.f32 %v331, %v356
    %v373 = vmax.f32 %v332, %v357
    %vm374 = vcmask 64513
    %375 = vst.msk [vmem:[#allocation7] sm:$0xfe] %vm374, %v366
    %376 = vst.msk [vmem:[#allocation7 + $0x8] sm:$0xfe] %vm374, %v367
    %377 = vst.msk [vmem:[#allocation7 + $0x10] sm:$0xfe] %vm374, %v368
    %378 = vst.msk [vmem:[#allocation7 + $0x18] sm:$0xfe] %vm374, %v369
    %379 = vst.msk [vmem:[#allocation7 + $0x20] sm:$0xfe] %vm374, %v370
    %380 = vst.msk [vmem:[#allocation7 + $0x28] sm:$0xfe] %vm374, %v371
    %381 = vst.msk [vmem:[#allocation7 + $0x30] sm:$0xfe] %vm374, %v372
    %382 = vst.msk [vmem:[#allocation7 + $0x38] sm:$0xfe] %vm374, %v373
    // Predicated region
    $region18: #{tpu_custom_call.1} parent=1 // pred_check
      _
    $region19: #{tpu_custom_call.1} parent=1 // pred_check_branch
      %384 = sbr.rel (0) target = $region21
    $region20: #{tpu_custom_call.1} parent=1 // pred_region
      %386 = vsyncadd [#allocation4], 0
      %s387 = sshll.u32 [#allocation7], 4
      %s388 = int_to_ptr.vmem [resolvable:$true] %s387
      %s389 = sshll.u32 %s2, 4
      %s390 = int_to_ptr.hbm [resolvable:$true] %s389
      %395 = dma.vmem_to_hbm [thread:$0]  %s388, 1024, %s390, [#allocation4], 128, 128, 8
    $region21: #{tpu_custom_call.1} parent=1 // pred_fallthru
      _
    // Predicated region
    $region22: #{tpu_custom_call.1} parent=1 // pred_check
      _
    $region23: #{tpu_custom_call.1} parent=1 // pred_check_branch
      %397 = sbr.rel (0) target = $region25
    $region24: #{tpu_custom_call.1} parent=1 // pred_region
      %399 = dma.done [#allocation4], 1024
    $region25: #{tpu_custom_call.1} parent=1 // pred_fallthru
      _
    %400 = vsyncpa [#allocation3], 1
    %401 = vsyncpa [#allocation6], 1
    %402 = vsyncpa [#allocation4], 1

</llo_original>
